<compile_context>
chip_gen: v5e
topology: v5e:2x2
jax: 0.10.0
libtpu: 0.0.40
codegen_flags: <defaults>
</compile_context>

<pallas_src>
import math

import jax
import jax.numpy as jnp
from jax.experimental import pallas as pl
from jax.experimental.pallas import tpu as pltpu


def linear_clamp_kernel(x_smem, w_ref, b_ref, o_ref):
    # Tiny [B, IN] x [IN, OUT] contraction.  x rows are SMEM scalars, so every
    # MAC is a plain VPU op with an sreg scalar operand; the MXU / XLU are not
    # touched (a padded vmatmul + result-FIFO pop would cost far more than
    # ~16 MACs).
    B, _ = o_ref.shape
    IN = w_ref.shape[0]
    w = w_ref[...]                      # [IN, OUT] f32 (fits in one vreg tile)
    b = b_ref[...]                      # [1, OUT]  f32
    for r in range(B):                  # B == 1 for this module; static unroll
        y = b                           # seed accumulator with bias (free add)
        for i in range(IN):             # static unroll, pure VPU
            y = y + x_smem[r, i] * w[i:i + 1, :]
        y = jnp.maximum(y, -2.0)        # clamp_min(-2)
        y = jnp.minimum(y, 1.0)         # clamp_max(1)
        o_ref[pl.ds(r, 1), :] = y.astype(o_ref.dtype)


@jax.jit
def linear_clamp(x, w, b2d):
    """x: [B, IN] f32, w: [IN, OUT] f32, b2d: [1, OUT] f32 -> [B, OUT] f32."""
    B, IN = x.shape
    OUT = w.shape[1]

    itemsize = jnp.dtype(x.dtype).itemsize
    cost = pl.CostEstimate(
        flops=2 * B * IN * OUT + 2 * B * OUT,
        transcendentals=0,
        bytes_accessed=(x.size + w.size + b2d.size + B * OUT) * itemsize,
    )

    # Single-step problem: grid-less call, everything resident on-chip.
    # TODO(synk): at this size a plain fused `jnp.clip(x @ w + b, -2, 1)` would
    # let XLA fuse with neighbors; kept as a Pallas kernel per the task spec.
    return pl.pallas_call(
        linear_clamp_kernel,
        out_shape=jax.ShapeDtypeStruct((B, OUT), x.dtype),
        in_specs=[
            pl.BlockSpec(memory_space=pltpu.MemorySpace.SMEM),   # x -> scalars
            pl.BlockSpec(memory_space=pltpu.MemorySpace.VMEM),   # w
            pl.BlockSpec(memory_space=pltpu.MemorySpace.VMEM),   # bias [1, OUT]
        ],
        out_specs=pl.BlockSpec(memory_space=pltpu.MemorySpace.VMEM),
        cost_estimate=cost,
    )(x, w, b2d)


if __name__ == "__main__":
    key = jax.random.PRNGKey(0)
    kx, kw, kb = jax.random.split(key, 3)

    # Module input: x = torch.randn(1, 4)
    x = jax.random.normal(kx, (1, 4), dtype=jnp.float32)

    # Deterministic Linear(4, 4) parameters (PyTorch-style uniform init bound).
    IN, OUT = 4, 4
    bound = 1.0 / math.sqrt(IN)
    w_pt = jax.random.uniform(kw, (OUT, IN), jnp.float32, -bound, bound)  # [OUT, IN]
    b = jax.random.uniform(kb, (OUT,), jnp.float32, -bound, bound)

    # One-time parameter packing (outside the per-call path):
    w = w_pt.T                 # kernel layout [IN, OUT]
    b2d = b.reshape(1, OUT)    # bias as a [1, OUT] VMEM operand

    out = linear_clamp(x, w, b2d)
    jax.block_until_ready(out)

    # Reference check in plain JAX.
    ref = jnp.clip(x @ w + b[None, :], -2.0, 1.0)
    assert out.shape == (1, 4)
    assert jnp.allclose(out, ref, atol=1e-5, rtol=1e-5)

    print("KERNEL_OK")
</pallas_src>

<mosaic_0001>
module attributes {stable_mosaic.version = 11 : i64} {
  func.func @linear_clamp_kernel(%arg0: memref<1x4xf32, #tpu.memory_space<smem>>, %arg1: memref<4x4xf32, #tpu.memory_space<vmem>>, %arg2: memref<1x4xf32, #tpu.memory_space<vmem>>, %arg3: memref<1x4xf32, #tpu.memory_space<vmem>>) attributes {dimension_semantics = [], scalar_prefetch = 0 : i64, scratch_operands = 0 : i64, tpu.core_type = #tpu.core_type<tc>} {
    %c0 = arith.constant 0 : index
    %c0_0 = arith.constant 0 : index
    %0 = vector.load %arg1[%c0, %c0_0] : memref<4x4xf32, #tpu.memory_space<vmem>>, vector<4x4xf32>
    %c0_1 = arith.constant 0 : index
    %c0_2 = arith.constant 0 : index
    %1 = vector.load %arg2[%c0_1, %c0_2] : memref<1x4xf32, #tpu.memory_space<vmem>>, vector<1x4xf32>
    %c0_3 = arith.constant 0 : index
    %c0_4 = arith.constant 0 : index
    %2 = memref.load %arg0[%c0_3, %c0_4] : memref<1x4xf32, #tpu.memory_space<smem>>
    %3 = vector.extract_strided_slice %0 {offsets = [0, 0], sizes = [1, 4], strides = [1, 1]} : vector<4x4xf32> to vector<1x4xf32>
    %4 = vector.broadcast %2 : f32 to vector<1x4xf32>
    %5 = arith.mulf %4, %3 : vector<1x4xf32>
    %6 = arith.addf %1, %5 : vector<1x4xf32>
    %c0_5 = arith.constant 0 : index
    %c1 = arith.constant 1 : index
    %7 = memref.load %arg0[%c0_5, %c1] : memref<1x4xf32, #tpu.memory_space<smem>>
    %8 = vector.extract_strided_slice %0 {offsets = [1, 0], sizes = [1, 4], strides = [1, 1]} : vector<4x4xf32> to vector<1x4xf32>
    %9 = vector.broadcast %7 : f32 to vector<1x4xf32>
    %10 = arith.mulf %9, %8 : vector<1x4xf32>
    %11 = arith.addf %6, %10 : vector<1x4xf32>
    %c0_6 = arith.constant 0 : index
    %c2 = arith.constant 2 : index
    %12 = memref.load %arg0[%c0_6, %c2] : memref<1x4xf32, #tpu.memory_space<smem>>
    %13 = vector.extract_strided_slice %0 {offsets = [2, 0], sizes = [1, 4], strides = [1, 1]} : vector<4x4xf32> to vector<1x4xf32>
    %14 = vector.broadcast %12 : f32 to vector<1x4xf32>
    %15 = arith.mulf %14, %13 : vector<1x4xf32>
    %16 = arith.addf %11, %15 : vector<1x4xf32>
    %c0_7 = arith.constant 0 : index
    %c3 = arith.constant 3 : index
    %17 = memref.load %arg0[%c0_7, %c3] : memref<1x4xf32, #tpu.memory_space<smem>>
    %18 = vector.extract_strided_slice %0 {offsets = [3, 0], sizes = [1, 4], strides = [1, 1]} : vector<4x4xf32> to vector<1x4xf32>
    %19 = vector.broadcast %17 : f32 to vector<1x4xf32>
    %20 = arith.mulf %19, %18 : vector<1x4xf32>
    %21 = arith.addf %16, %20 : vector<1x4xf32>
    %cst = arith.constant -2.000000e+00 : f32
    %22 = vector.broadcast %cst : f32 to vector<1x4xf32>
    %23 = arith.maximumf %21, %22 : vector<1x4xf32>
    %cst_8 = arith.constant 1.000000e+00 : f32
    %24 = vector.broadcast %cst_8 : f32 to vector<1x4xf32>
    %25 = arith.minimumf %23, %24 : vector<1x4xf32>
    %c0_9 = arith.constant 0 : index
    %c0_10 = arith.constant 0 : index
    %26 = vector.load %arg3[%c0_9, %c0_10] : memref<1x4xf32, #tpu.memory_space<vmem>>, vector<1x4xf32>
    tpu.vector_store %arg3[%c0_9, %c0_10], %25 {strides = array<i32>} : memref<1x4xf32, #tpu.memory_space<vmem>>, vector<1x4xf32>,
    return
  }
}

</mosaic_0001>

<llo_original>
// kernel: linear_clamp.1
$region0: #{linear_clamp.1}
  #allocation0 [shape = 'u32[]', space=smem, size = 0x4, offset = 0x4, fixed_abs, tag = 'smem constant byte address 0x4 - core index']
  #allocation1 [shape = 'u32[72,128]{1,0:T(1,128)}', space=vmem, size = 0x9000, scoped, tag = 'internal scratch']
  %s0 = inlined_call_operand.hbm [shape: f32[1,4], index: 0, kind: input, shape index: {}]
  %s1 = inlined_call_operand.hbm [shape: f32[4,4], index: 1, kind: input, shape index: {}]
  %s2 = inlined_call_operand.vmem [shape: f32[1,4], index: 2, kind: input, shape index: {}]
  %s3 = inlined_call_operand.hbm [shape: f32[1,4], index: 3, kind: output, shape index: {}]
  %s4 = sld [smem:[#allocation0]]
  $region30: #{linear_clamp.1} parent=0
    _
  %s6 = ssub.s32 1, %s4
  %s7 = scalar_select 0, %s6, %s4
  $region1: #{linear_clamp.1} parent=0
    #allocation2 [shape = 'u8[512]{0}', space=smem, size = 0x200, scoped, tag = 'input window, operand 0, single buffered']
    #allocation3 [shape = 's32[1]{0}', space=sflag, size = 0x4, scoped, tag = 'scoped memory for linear_clamp.1']
    #allocation4 [shape = 's32[1]{0}', space=sflag, size = 0x4, scoped, tag = 'scoped memory for linear_clamp.1']
    #allocation5 [shape = 's32[1]{0}', space=sflag, size = 0x4, scoped, tag = 'scoped memory for linear_clamp.1']
    #allocation6 [shape = 'u8[2048]{0}', space=vmem, size = 0x800, scoped, tag = 'input window, operand 1, single buffered']
    #allocation7 [shape = 'u8[512]{0}', space=vmem, size = 0x400, scoped, tag = 'output window, operand 0, single buffered']
    %8 = vsyncpa [#allocation5], 0
    %9 = vsyncpa [#allocation3], 0
    %10 = vsyncpa [#allocation4], 0
    // Predicated region
    $region2: #{linear_clamp.1} parent=1 // pred_check
      _
    $region3: #{linear_clamp.1} parent=1 // pred_check_branch
      %12 = sbr.rel (0) target = $region5
    $region4: #{linear_clamp.1} parent=1 // pred_region
      %14 = vsyncadd [#allocation5], 0
      %s16 = sshll.u32 %s0, 4
      %s17 = int_to_ptr.hbm [resolvable:$true] %s16
      %19 = dma.hbm_to_smem %s17, 16, [#allocation2], [#allocation5]
    $region5: #{linear_clamp.1} parent=1 // pred_fallthru
      _
    // Predicated region
    $region6: #{linear_clamp.1} parent=1 // pred_check
      _
    $region7: #{linear_clamp.1} parent=1 // pred_check_branch
      %21 = sbr.rel (0) target = $region9
    $region8: #{linear_clamp.1} parent=1 // pred_region
      %23 = vsyncadd [#allocation3], 0
      %s25 = sshll.u32 %s1, 4
      %s26 = int_to_ptr.hbm [resolvable:$true] %s25
      %s27 = sshll.u32 [#allocation6], 4
      %s28 = int_to_ptr.vmem [resolvable:$true] %s27
      %30 = dma.hbm_to_vmem [thread:$0]  %s26, 64, %s28, [#allocation3]
    $region9: #{linear_clamp.1} parent=1 // pred_fallthru
      _
    // Predicated region
    $region10: #{linear_clamp.1} parent=1 // pred_check
      _
    $region11: #{linear_clamp.1} parent=1 // pred_check_branch
      %32 = sbr.rel (0) target = $region13
    $region12: #{linear_clamp.1} parent=1 // pred_region
      _
    $region13: #{linear_clamp.1} parent=1 // pred_fallthru
      _
    // Predicated region
    $region14: #{linear_clamp.1} parent=1 // pred_check
      _
    $region15: #{linear_clamp.1} parent=1 // pred_check_branch
      %34 = sbr.rel (0) target = $region17
    $region16: #{linear_clamp.1} parent=1 // pred_region
      %36 = dma.done [#allocation5], 16
    $region17: #{linear_clamp.1} parent=1 // pred_fallthru
      _
    // Predicated region
    $region18: #{linear_clamp.1} parent=1 // pred_check
      _
    $region19: #{linear_clamp.1} parent=1 // pred_check_branch
      %38 = sbr.rel (0) target = $region21
    $region20: #{linear_clamp.1} parent=1 // pred_region
      %40 = dma.done [#allocation3], 64
    $region21: #{linear_clamp.1} parent=1 // pred_fallthru
      _
    %41 = sfence
    %v42 = vld [vmem:[#allocation6] sm:$0xf]
    %v43 = vld [vmem:[%s2] sm:$0x1]
    %s44 = sld [smem:[#allocation2]]
    %v45 = vstv %s44
    %v46 = vmul.f32 %v45, %v42
    %v47 = vadd.f32 %v43, %v46
    %s48 = sld [smem:[#allocation2 + $0x1]]
    %v49 = vstv %s48
    %v50 = vmul.f32 %v49, %v42
    %52 = vst [vmem:[#allocation1] sm:$0xff] %v50
    %s53 = scalar_lea.vmem [#allocation1], 1
    %v54 = vld [vmem:[%s53] ss:$9 sm:$0xff]
    %v56 = vadd.f32 %v47, %v54
    %s57 = sld [smem:[#allocation2 + $0x2]]
    %v58 = vstv %s57
    %v59 = vmul.f32 %v58, %v42
    %61 = vst [vmem:[#allocation1] sm:$0xff] %v59
    %s62 = scalar_lea.vmem [#allocation1], 2
    %v63 = vld [vmem:[%s62] ss:$9 sm:$0xff]
    %v65 = vadd.f32 %v56, %v63
    %s66 = sld [smem:[#allocation2 + $0x3]]
    %v67 = vstv %s66
    %v68 = vmul.f32 %v67, %v42
    %70 = vst [vmem:[#allocation1] sm:$0xff] %v68
    %s71 = scalar_lea.vmem [#allocation1], 3
    %v72 = vld [vmem:[%s71] ss:$9 sm:$0xff]
    %v74 = vadd.f32 %v65, %v72
    %v75 = vmax.f32 %v74, -2.0
    %v76 = vmin.f32 %v75, 1.0
    %vm77 = vcmask 24576
    %78 = vst.msk [vmem:[#allocation7] sm:$0x1] %vm77, %v76
    // Predicated region
    $region22: #{linear_clamp.1} parent=1 // pred_check
      _
    $region23: #{linear_clamp.1} parent=1 // pred_check_branch
      %80 = sbr.rel (0) target = $region25
    $region24: #{linear_clamp.1} parent=1 // pred_region
      %82 = vsyncadd [#allocation4], 0
      %s84 = sshll.u32 [#allocation7], 4
      %s85 = int_to_ptr.vmem [resolvable:$true] %s84
      %s86 = sshll.u32 %s3, 4
      %s87 = int_to_ptr.hbm [resolvable:$true] %s86
      %89 = dma.vmem_to_hbm [thread:$0]  %s85, 16, %s87, [#allocation4]
    $region25: #{linear_clamp.1} parent=1 // pred_fallthru
      _
    // Predicated region
    $region26: #{linear_clamp.1} parent=1 // pred_check
      _
    $region27: #{linear_clamp.1} parent=1 // pred_check_branch
      %91 = sbr.rel (0) target = $region29
    $region28: #{linear_clamp.1} parent=1 // pred_region
      %93 = dma.done [#allocation4], 16
    $region29: #{linear_clamp.1} parent=1 // pred_fallthru
      _
    %94 = vsyncpa [#allocation3], 1
    %95 = vsyncpa [#allocation4], 1
    %96 = vsyncpa [#allocation5], 1

</llo_original>
